<compile_context>
chip_gen: v5e
topology: v5e:2x2
jax: 0.10.0
libtpu: 0.0.40
codegen_flags: <defaults>
</compile_context>

<pallas_src>
import functools
import math

import jax
import jax.numpy as jnp
from jax.experimental import pallas as pl
from jax.experimental.pallas import tpu as pltpu

EXPANSION = 4                      # bottleneck expansion
_VMEM_LIMIT = 48 * 1024 * 1024     # safe on v5e/v6e (128 MiB) and v7x (64 MiB)
_BN_EPS = 1e-5


def _pick_tile(dim, cap, quantum):
    """Largest tile <= cap that divides `dim` and is a multiple of `quantum`,
    falling back to the full dim (a full-extent block is always legal)."""
    if dim <= cap:
        return dim
    t = (cap // quantum) * quantum
    while t >= quantum:
        if dim % t == 0:
            return t
        t -= quantum
    return dim


# ----------------------------- matmul kernels ------------------------------

def _matmul_kernel(a_ref, b_ref, o_ref, acc_ref):
    @pl.when(pl.program_id(2) == 0)
    def _():
        acc_ref[...] = jnp.zeros_like(acc_ref)
    acc_ref[...] += jnp.dot(a_ref[...], b_ref[...],
                            preferred_element_type=jnp.float32)
    @pl.when(pl.program_id(2) == pl.num_programs(2) - 1)
    def _():
        o_ref[...] = acc_ref[...]


def matmul(a, b):
    """Tiled (M,K)x(K,N)->(M,N) matmul, bf16 operands, fp32 accumulation."""
    a = a.astype(jnp.bfloat16)
    b = b.astype(jnp.bfloat16)
    m, k = a.shape
    k2, n = b.shape
    assert k == k2
    tm = _pick_tile(m, 512, 8)
    tn = _pick_tile(n, 256, 128)
    tk = _pick_tile(k, 512, 128)
    grid = (m // tm, n // tn, k // tk)
    return pl.pallas_call(
        _matmul_kernel,
        out_shape=jax.ShapeDtypeStruct((m, n), jnp.float32),
        grid=grid,
        in_specs=[pl.BlockSpec((tm, tk), lambda i, j, kk: (i, kk)),
                  pl.BlockSpec((tk, tn), lambda i, j, kk: (kk, j))],
        out_specs=pl.BlockSpec((tm, tn), lambda i, j, kk: (i, j)),
        scratch_shapes=[pltpu.VMEM((tm, tn), jnp.float32)],
        compiler_params=pltpu.CompilerParams(
            dimension_semantics=("parallel", "parallel", "arbitrary"),
            vmem_limit_bytes=_VMEM_LIMIT),
    )(a, b)


def _gmm_kernel(a_ref, b_ref, o_ref, acc_ref):
    @pl.when(pl.program_id(2) == 0)
    def _():
        acc_ref[...] = jnp.zeros_like(acc_ref)
    acc_ref[...] += jnp.dot(a_ref[...], b_ref[0],
                            preferred_element_type=jnp.float32)
    @pl.when(pl.program_id(2) == pl.num_programs(2) - 1)
    def _():
        o_ref[...] = acc_ref[...]


def grouped_matmul(a, b_stacked):
    """Grouped conv matmul.

    a:         (M, SG*Ksg) im2col with group-contiguous K layout.
    b_stacked: (SG, Ksg, Nsg) block-diagonal per super-group weights (bf16).
    out:       (M, SG*Nsg) -- each super-group writes its own channel slice.
    """
    a = a.astype(jnp.bfloat16)
    m = a.shape[0]
    sg, ksg, nsg = b_stacked.shape
    assert a.shape[1] == sg * ksg
    tm = _pick_tile(m, 512, 8)
    tk = _pick_tile(ksg, 512, 128)
    assert sg == 1 or tk % 128 == 0, "K tile must stay lane-aligned"
    kb = ksg // tk
    cout = sg * nsg
    return pl.pallas_call(
        _gmm_kernel,
        out_shape=jax.ShapeDtypeStruct((m, cout), jnp.float32),
        grid=(sg, m // tm, kb),
        in_specs=[pl.BlockSpec((tm, tk), lambda s, i, k: (i, s * kb + k)),
                  pl.BlockSpec((1, tk, nsg), lambda s, i, k: (s, k, 0))],
        out_specs=pl.BlockSpec((tm, nsg), lambda s, i, k: (i, s)),
        scratch_shapes=[pltpu.VMEM((tm, nsg), jnp.float32)],
        compiler_params=pltpu.CompilerParams(
            dimension_semantics=("parallel", "parallel", "arbitrary"),
            vmem_limit_bytes=_VMEM_LIMIT),
    )(a, b_stacked)


# ------------------------------ batchnorm -----------------------------------

def _bn_stats_kernel(x_ref, mean_ref, m2_ref, mean_acc, m2_acc, *, tm):
    # Streaming Welford/Chan merge across M tiles: numerically safe per-channel
    # mean and centered sum-of-squares (avoids E[x^2]-E[x]^2 cancellation).
    i = pl.program_id(0)
    x = x_ref[...]
    tmean = jnp.mean(x, axis=0, keepdims=True)            # (1, C)
    xc = x - tmean
    tm2 = jnp.sum(xc * xc, axis=0, keepdims=True)          # (1, C)

    @pl.when(i == 0)
    def _():
        mean_acc[...] = tmean
        m2_acc[...] = tm2

    @pl.when(i > 0)
    def _():
        nt = float(tm)
        n_prev = i.astype(jnp.float32) * nt
        n_tot = n_prev + nt
        delta = tmean - mean_acc[...]
        mean_acc[...] = mean_acc[...] + delta * (nt / n_tot)
        m2_acc[...] = m2_acc[...] + tm2 + (delta * delta) * (n_prev * nt / n_tot)

    @pl.when(i == pl.num_programs(0) - 1)
    def _():
        mean_ref[...] = mean_acc[...]
        m2_ref[...] = m2_acc[...]


def _bn_apply_kernel(x_ref, mean_ref, var_ref, o_ref, *, relu, eps):
    inv = jax.lax.rsqrt(var_ref[...] + eps)
    y = (x_ref[...] - mean_ref[...]) * inv
    if relu:
        y = jnp.maximum(y, 0.0)
    o_ref[...] = y


def _bn_add_relu_kernel(x_ref, res_ref, mean_ref, var_ref, o_ref, *, eps):
    inv = jax.lax.rsqrt(var_ref[...] + eps)
    y = (x_ref[...] - mean_ref[...]) * inv + res_ref[...]
    o_ref[...] = jnp.maximum(y, 0.0)


def batchnorm(x, relu=False, residual=None, eps=_BN_EPS):
    """Training-mode BatchNorm2d (weight=1, bias=0, biased batch variance),
    with optional fused ReLU and fused residual-add+ReLU."""
    n, h, w, c = x.shape
    m = n * h * w
    x2 = x.reshape(m, c)
    tm = _pick_tile(m, 1024, 8)
    grid = (m // tm,)

    mean, m2 = pl.pallas_call(
        functools.partial(_bn_stats_kernel, tm=tm),
        out_shape=(jax.ShapeDtypeStruct((1, c), jnp.float32),
                   jax.ShapeDtypeStruct((1, c), jnp.float32)),
        grid=grid,
        in_specs=[pl.BlockSpec((tm, c), lambda i: (i, 0))],
        out_specs=(pl.BlockSpec((1, c), lambda i: (0, 0)),
                   pl.BlockSpec((1, c), lambda i: (0, 0))),
        scratch_shapes=[pltpu.VMEM((1, c), jnp.float32),
                        pltpu.VMEM((1, c), jnp.float32)],
        compiler_params=pltpu.CompilerParams(
            dimension_semantics=("arbitrary",)),
    )(x2)
    var = m2 * (1.0 / m)   # biased variance, as PyTorch BN uses for normalization

    small_spec = pl.BlockSpec((1, c), lambda i: (0, 0))
    tile_spec = pl.BlockSpec((tm, c), lambda i: (i, 0))
    if residual is None:
        kern = functools.partial(_bn_apply_kernel, relu=relu, eps=eps)
        args = (x2, mean, var)
        in_specs = [tile_spec, small_spec, small_spec]
    else:
        kern = functools.partial(_bn_add_relu_kernel, eps=eps)
        args = (x2, residual.reshape(m, c), mean, var)
        in_specs = [tile_spec, tile_spec, small_spec, small_spec]

    y = pl.pallas_call(
        kern,
        out_shape=jax.ShapeDtypeStruct((m, c), jnp.float32),
        grid=grid,
        in_specs=in_specs,
        out_specs=tile_spec,
        compiler_params=pltpu.CompilerParams(
            dimension_semantics=("parallel",)),
    )(*args)
    return y.reshape(n, h, w, c)


# --------------------------- pooling / ESE / heads ---------------------------

def _pool_kernel(x_ref, o_ref, acc_ref, *, inv_hw):
    j = pl.program_id(1)

    @pl.when(j == 0)
    def _():
        acc_ref[...] = jnp.zeros_like(acc_ref)
    acc_ref[...] += jnp.sum(x_ref[0], axis=0, keepdims=True)

    @pl.when(j == pl.num_programs(1) - 1)
    def _():
        o_ref[0] = acc_ref[...] * inv_hw


def global_avgpool(x):
    """(N,H,W,C) -> (N,C), tiled over the spatial axis."""
    n, h, w, c = x.shape
    hw = h * w
    thw = _pick_tile(hw, 2048, 8)
    out = pl.pallas_call(
        functools.partial(_pool_kernel, inv_hw=1.0 / hw),
        out_shape=jax.ShapeDtypeStruct((n, 1, c), jnp.float32),
        grid=(n, hw // thw),
        in_specs=[pl.BlockSpec((1, thw, c), lambda i, j: (i, j, 0))],
        out_specs=pl.BlockSpec((1, 1, c), lambda i, j: (i, 0, 0)),
        scratch_shapes=[pltpu.VMEM((1, c), jnp.float32)],
        compiler_params=pltpu.CompilerParams(
            dimension_semantics=("parallel", "arbitrary")),
    )(x.reshape(n, hw, c))
    return out.reshape(n, c)


def _ese_gate_kernel(p_ref, w_ref, b_ref, g_ref):
    y = jnp.dot(p_ref[...].astype(jnp.bfloat16), w_ref[...],
                preferred_element_type=jnp.float32) + b_ref[...]
    g_ref[...] = 1.0 / (1.0 + jnp.exp(-y))     # sigmoid (EUP exp)


def _scale_kernel(x_ref, g_ref, o_ref):
    o_ref[...] = x_ref[...] * g_ref[...]


def ese_scale(x, se_p):
    """ESE: global avg-pool -> Linear -> sigmoid gate -> channel scale.
    The gate matmul is batched over all N samples in a single call."""
    n, h, w, c = x.shape
    hw = h * w
    pooled = global_avgpool(x)                                      # (N, C)
    gate = pl.pallas_call(
        _ese_gate_kernel,
        out_shape=jax.ShapeDtypeStruct((n, c), jnp.float32),
    )(pooled, se_p["w_t"], se_p["b"].reshape(1, c))
    thw = _pick_tile(hw, 2048, 8)
    y = pl.pallas_call(
        _scale_kernel,
        out_shape=jax.ShapeDtypeStruct((n, hw, c), jnp.float32),
        grid=(n, hw // thw),
        in_specs=[pl.BlockSpec((1, thw, c), lambda i, j: (i, j, 0)),
                  pl.BlockSpec((1, 1, c), lambda i, j: (i, 0, 0))],
        out_specs=pl.BlockSpec((1, thw, c), lambda i, j: (i, j, 0)),
        compiler_params=pltpu.CompilerParams(
            dimension_semantics=("parallel", "parallel")),
    )(x.reshape(n, hw, c), gate.reshape(n, 1, c))
    return y.reshape(n, h, w, c)


def _linear_kernel(x_ref, w_ref, b_ref, o_ref):
    o_ref[...] = jnp.dot(x_ref[...].astype(jnp.bfloat16), w_ref[...],
                         preferred_element_type=jnp.float32) + b_ref[...]


def heads_linear(x, w_t, b):
    """Merged fc + classifer heads: one (N, 2*num_classes) matmul."""
    m, _ = x.shape
    n = w_t.shape[1]
    return pl.pallas_call(
        _linear_kernel,
        out_shape=jax.ShapeDtypeStruct((m, n), jnp.float32),
    )(x, w_t, b.reshape(1, n))


# ------------------------------ conv glue (im2col) ---------------------------

def _im2col_dense(x, kh, kw, stride, padding):
    n, h, w, c = x.shape
    if padding:
        x = jnp.pad(x, ((0, 0), (padding, padding), (padding, padding), (0, 0)))
    oh = (h + 2 * padding - kh) // stride + 1
    ow = (w + 2 * padding - kw) // stride + 1
    cols = [x[:, i:i + stride * oh:stride, j:j + stride * ow:stride, :]
            for i in range(kh) for j in range(kw)]
    return jnp.concatenate(cols, axis=-1).reshape(n * oh * ow, kh * kw * c)


def _im2col_grouped(x, kh, kw, stride, padding, groups):
    # K layout is group-contiguous: (group, tap, cin_g) so each (super-)group's
    # K slice is a contiguous block for the grouped-matmul BlockSpec.
    n, h, w, c = x.shape
    cg = c // groups
    if padding:
        x = jnp.pad(x, ((0, 0), (padding, padding), (padding, padding), (0, 0)))
    oh = (h + 2 * padding - kh) // stride + 1
    ow = (w + 2 * padding - kw) // stride + 1
    cols = [x[:, i:i + stride * oh:stride, j:j + stride * ow:stride,
              g * cg:(g + 1) * cg]
            for g in range(groups) for i in range(kh) for j in range(kw)]
    return jnp.concatenate(cols, axis=-1).reshape(n * oh * ow, groups * kh * kw * cg)


def conv2d(x, cp):
    """x: (N,H,W,Cin) NHWC fp32.  cp: preprocessed conv params (see init)."""
    n, h, w, _ = x.shape
    kh, kw, stride, padding = cp["kh"], cp["kw"], cp["stride"], cp["padding"]
    oh = (h + 2 * padding - kh) // stride + 1
    ow = (w + 2 * padding - kw) // stride + 1
    xb = x.astype(jnp.bfloat16)                     # bf16 matmul operands
    if cp["kind"] == "dense":
        if kh == 1 and kw == 1 and padding == 0:
            xs = xb[:, ::stride, ::stride, :] if stride > 1 else xb
            cols = xs.reshape(n * oh * ow, cp["cin"])
        else:
            cols = _im2col_dense(xb, kh, kw, stride, padding)
        out = matmul(cols, cp["w"])
    else:
        cols = _im2col_grouped(xb, kh, kw, stride, padding, cp["groups"])
        out = grouped_matmul(cols, cp["w"])
    return out.reshape(n, oh, ow, cp["cout"])


# --------------------------- parameter init ----------------------------------

def _conv_w(key, cout, cin, kh, kw):
    # matches module init: normal(0, sqrt(2 / (k*k*out_channels)))
    std = math.sqrt(2.0 / (kh * kw * cout))
    return std * jax.random.normal(key, (cout, cin, kh, kw), dtype=jnp.float32)


def _linear_p(key, fin, fout):
    kw_, kb = jax.random.split(key)
    bound = 1.0 / math.sqrt(fin)
    return {
        "w_t": jax.random.uniform(kw_, (fin, fout), minval=-bound, maxval=bound,
                                  dtype=jnp.float32),
        "b": jax.random.uniform(kb, (fout,), minval=-bound, maxval=bound,
                                dtype=jnp.float32),
    }


def _ese_p(key, c):
    p = _linear_p(key, c, c)
    return {"w_t": p["w_t"].astype(jnp.bfloat16), "b": p["b"]}


def _prep_dense_conv(w, stride, padding):
    cout, cin, kh, kw = w.shape
    wm = jnp.transpose(w, (2, 3, 1, 0)).reshape(kh * kw * cin, cout)
    return {"kind": "dense", "w": wm.astype(jnp.bfloat16), "kh": kh, "kw": kw,
            "stride": stride, "padding": padding, "cin": cin, "cout": cout}


def _prep_grouped_conv(w, stride, padding, groups):
    cout, cin_g, kh, kw = w.shape
    cg_out = cout // groups
    # pack groups along N so each super-group's output is >= 128 lanes wide
    g_pack = min(groups, max(1, 128 // cg_out))
    while groups % g_pack:
        g_pack -= 1
    sg = groups // g_pack
    kg = kh * kw * cin_g
    ksg = g_pack * kg
    nsg = g_pack * cg_out
    b = jnp.zeros((sg, ksg, nsg), jnp.float32)
    for s in range(sg):
        for p in range(g_pack):
            g = s * g_pack + p
            wg = w[g * cg_out:(g + 1) * cg_out]               # (cg_out,cin_g,kh,kw)
            wm = jnp.transpose(wg, (2, 3, 1, 0)).reshape(kg, cg_out)
            b = b.at[s, p * kg:(p + 1) * kg, p * cg_out:(p + 1) * cg_out].set(wm)
    return {"kind": "grouped", "w": b.astype(jnp.bfloat16), "kh": kh, "kw": kw,
            "stride": stride, "padding": padding, "groups": groups,
            "cin": cin_g * groups, "cout": cout}


def _prep_conv(w, stride, padding, groups=1):
    if groups == 1:
        return _prep_dense_conv(w, stride, padding)
    return _prep_grouped_conv(w, stride, padding, groups)


def init_resnext(key, layers, num_classes, num_group):
    keys = iter(jax.random.split(key, 256))
    params = {}
    params["conv1"] = _prep_dense_conv(_conv_w(next(keys), 64, 3, 3, 3), 1, 1)
    params["se0"] = _ese_p(next(keys), 64)
    params["se1"] = _ese_p(next(keys), 64 * EXPANSION)
    params["se2"] = _ese_p(next(keys), 128 * EXPANSION)
    params["se3"] = _ese_p(next(keys), 256 * EXPANSION)
    inplanes = 64
    for li, (planes, blocks, stride) in enumerate(
            zip((64, 128, 256, 512), layers, (1, 2, 2, 2))):
        blocks_p = []
        for bi in range(blocks):
            s = stride if bi == 0 else 1
            width = planes * 2
            bp = {}
            bp["conv1"] = _prep_conv(_conv_w(next(keys), width, inplanes, 1, 1), 1, 0)
            bp["conv2"] = _prep_conv(_conv_w(next(keys), width, width // num_group, 3, 3),
                                     s, 1, num_group)
            bp["conv3"] = _prep_conv(_conv_w(next(keys), planes * EXPANSION, width, 1, 1), 1, 0)
            if bi == 0 and (s != 1 or inplanes != planes * EXPANSION):
                bp["ds"] = _prep_conv(_conv_w(next(keys), planes * EXPANSION, inplanes, 1, 1), s, 0)
            inplanes = planes * EXPANSION
            blocks_p.append(bp)
        params[f"layer{li + 1}"] = blocks_p
    fc = _linear_p(next(keys), 512 * EXPANSION, num_classes)
    cls = _linear_p(next(keys), 512 * EXPANSION, num_classes)
    params["heads"] = {
        "w_t": jnp.concatenate([fc["w_t"], cls["w_t"]], axis=1).astype(jnp.bfloat16),
        "b": jnp.concatenate([fc["b"], cls["b"]]),
        "n": num_classes,
    }
    return params


# ------------------------------ forward pass ---------------------------------

def bottleneck_forward(x, p):
    out = conv2d(x, p["conv1"])                      # 1x1 reduce
    out = batchnorm(out, relu=True)
    out = conv2d(out, p["conv2"])                    # grouped 3x3
    out = batchnorm(out, relu=True)
    out = conv2d(out, p["conv3"])                    # 1x1 expand
    if "ds" in p:
        res = conv2d(x, p["ds"])
        res = batchnorm(res, relu=False)
    else:
        res = x
    return batchnorm(out, residual=res)              # fused BN + add + ReLU


def resnext_forward(params, x_nchw, rand_index=None, r=1.0):
    # x_nchw: (N, 3, H, W) like PyTorch; converted to NHWC internally.
    del rand_index  # only used by the (dead for r=1) feature-mix branches
    x = jnp.transpose(x_nchw, (0, 2, 3, 1)).astype(jnp.float32)
    x = conv2d(x, params["conv1"])
    x = batchnorm(x, relu=True)
    x = ese_scale(x, params["se0"])
    for bp in params["layer1"]:
        x = bottleneck_forward(x, bp)
    x = ese_scale(x, params["se1"])
    for bp in params["layer2"]:
        x = bottleneck_forward(x, bp)
    x = ese_scale(x, params["se2"])
    for bp in params["layer3"]:
        x = bottleneck_forward(x, bp)
    x = ese_scale(x, params["se3"])
    for bp in params["layer4"]:
        x = bottleneck_forward(x, bp)
    pooled = global_avgpool(x)                                   # (N, 2048)
    logits = heads_linear(pooled, params["heads"]["w_t"], params["heads"]["b"])
    nc = params["heads"]["n"]
    return logits[:, :nc], logits[:, nc:]


if __name__ == "__main__":
    key = jax.random.PRNGKey(0)
    pkey, xkey = jax.random.split(key)
    num_classes = 10
    params = init_resnext(pkey, layers=(1, 1, 1, 1), num_classes=num_classes,
                          num_group=4)
    x = jax.random.normal(xkey, (2, 3, 16, 16), dtype=jnp.float32)   # NCHW input
    x1, x2 = resnext_forward(params, x)
    jax.block_until_ready((x1, x2))
    assert x1.shape == (2, num_classes) and x2.shape == (2, num_classes)
    assert jnp.all(jnp.isfinite(x1)) and jnp.all(jnp.isfinite(x2))
    print("KERNEL_OK")
</pallas_src>

<mosaic_0001>
module attributes {stable_mosaic.version = 11 : i64} {
  func.func @_matmul_kernel(%arg0: i32, %arg1: i32, %arg2: i32, %arg3: memref<512x27xbf16, #tpu.memory_space<vmem>>, %arg4: memref<27x64xbf16, #tpu.memory_space<vmem>>, %arg5: memref<512x64xf32, #tpu.memory_space<vmem>>, %arg6: memref<512x64xf32, #tpu.memory_space<vmem>>) attributes {dimension_semantics = [#tpu.dimension_semantics<parallel>, #tpu.dimension_semantics<parallel>, #tpu.dimension_semantics<arbitrary>], iteration_bounds = array<i64: 1, 1, 1>, scalar_prefetch = 0 : i64, scratch_operands = 1 : i64, tpu.core_type = #tpu.core_type<tc>, window_params = [{transform_indices = @transform_0, window_bounds = array<i64: 512, 27>}, {transform_indices = @transform_1, window_bounds = array<i64: 27, 64>}, {transform_indices = @transform_2, window_bounds = array<i64: 512, 64>}]} {
    %c0_i32 = arith.constant 0 : i32
    %0 = arith.cmpi eq, %arg2, %c0_i32 : i32
    %1 = arith.extui %0 : i1 to i32
    %c0_i32_0 = arith.constant 0 : i32
    %2 = arith.cmpi ne, %1, %c0_i32_0 : i32
    scf.if %2 {
      %cst_10 = arith.constant 0.000000e+00 : f32
      %12 = vector.broadcast %cst_10 : f32 to vector<512x64xf32>
      %c0_11 = arith.constant 0 : index
      %c0_12 = arith.constant 0 : index
      %13 = vector.load %arg6[%c0_11, %c0_12] : memref<512x64xf32, #tpu.memory_space<vmem>>, vector<512x64xf32>
      tpu.vector_store %arg6[%c0_11, %c0_12], %12 {strides = array<i32>} : memref<512x64xf32, #tpu.memory_space<vmem>>, vector<512x64xf32>,
    } else {
    }
    %c0 = arith.constant 0 : index
    %c0_1 = arith.constant 0 : index
    %3 = vector.load %arg6[%c0, %c0_1] : memref<512x64xf32, #tpu.memory_space<vmem>>, vector<512x64xf32>
    %c0_2 = arith.constant 0 : index
    %c0_3 = arith.constant 0 : index
    %4 = vector.load %arg3[%c0_2, %c0_3] : memref<512x27xbf16, #tpu.memory_space<vmem>>, vector<512x27xbf16>
    %c0_4 = arith.constant 0 : index
    %c0_5 = arith.constant 0 : index
    %5 = vector.load %arg4[%c0_4, %c0_5] : memref<27x64xbf16, #tpu.memory_space<vmem>>, vector<27x64xbf16>
    %cst = arith.constant dense<0.000000e+00> : vector<512x64xf32>
    %6 = tpu.matmul %4, %5, %cst {dimension_numbers = #tpu.dot_dimension_numbers<[1], [0], [0], [1], [0, 0, 1, 1], [], []>} : vector<512x27xbf16>, vector<27x64xbf16>, vector<512x64xf32> -> vector<512x64xf32>
    %7 = arith.addf %3, %6 : vector<512x64xf32>
    %c0_6 = arith.constant 0 : index
    %c0_7 = arith.constant 0 : index
    %8 = vector.load %arg6[%c0_6, %c0_7] : memref<512x64xf32, #tpu.memory_space<vmem>>, vector<512x64xf32>
    tpu.vector_store %arg6[%c0_6, %c0_7], %7 {strides = array<i32>} : memref<512x64xf32, #tpu.memory_space<vmem>>, vector<512x64xf32>,
    %c0_i32_8 = arith.constant 0 : i32
    %9 = arith.cmpi eq, %arg2, %c0_i32_8 : i32
    %10 = arith.extui %9 : i1 to i32
    %c0_i32_9 = arith.constant 0 : i32
    %11 = arith.cmpi ne, %10, %c0_i32_9 : i32
    scf.if %11 {
      %c0_10 = arith.constant 0 : index
      %c0_11 = arith.constant 0 : index
      %12 = vector.load %arg6[%c0_10, %c0_11] : memref<512x64xf32, #tpu.memory_space<vmem>>, vector<512x64xf32>
      %c0_12 = arith.constant 0 : index
      %c0_13 = arith.constant 0 : index
      %13 = vector.load %arg5[%c0_12, %c0_13] : memref<512x64xf32, #tpu.memory_space<vmem>>, vector<512x64xf32>
      tpu.vector_store %arg5[%c0_12, %c0_13], %12 {strides = array<i32>} : memref<512x64xf32, #tpu.memory_space<vmem>>, vector<512x64xf32>,
    } else {
    }
    return
  }
  func.func @transform_0(%arg0: i32, %arg1: i32, %arg2: i32) -> (i32, i32) {
    %c0_i32 = arith.constant 0 : i32
    return %arg0, %arg2 : i32, i32
  }
  func.func @transform_1(%arg0: i32, %arg1: i32, %arg2: i32) -> (i32, i32) {
    %c0_i32 = arith.constant 0 : i32
    return %arg2, %arg1 : i32, i32
  }
  func.func @transform_2(%arg0: i32, %arg1: i32, %arg2: i32) -> (i32, i32) {
    %c0_i32 = arith.constant 0 : i32
    return %arg0, %arg1 : i32, i32
  }
}

</mosaic_0001>

<llo_original>
// kernel: tpu_custom_call.1
$region0: #{tpu_custom_call.1}
  #allocation0 [shape = 'u32[]', space=smem, size = 0x4, offset = 0x4, fixed_abs, tag = 'smem constant byte address 0x4 - core index']
  #allocation1 [shape = 'u32[72,128]{1,0:T(1,128)}', space=vmem, size = 0x9000, scoped, tag = 'internal scratch']
  #allocation2 [shape = 'f32[512,64]{1,0:T(8,128)}', space=vmem, size = 0x40000, scoped, tag = 'scratch operand']
  %s0 = inlined_call_operand.vmem [shape: bf16[512,27], index: 0, kind: input, shape index: {}]
  %s1 = inlined_call_operand.vmem [shape: bf16[27,64], index: 1, kind: input, shape index: {}]
  %s2 = inlined_call_operand.vmem [shape: f32[512,64], index: 2, kind: output, shape index: {}]
  %s3 = sld [smem:[#allocation0]]
  $region26: #{tpu_custom_call.1} parent=0
    _
  %s5 = ssub.s32 1, %s3
  %s6 = scalar_select 0, %s5, %s3
  // Predicated region
  $region2: #{tpu_custom_call.1} parent=0 // pred_check
    _
  $region3: #{tpu_custom_call.1} parent=0 // pred_check_branch
    %8 = sbr.rel (0) target = $region5
  $region4: #{tpu_custom_call.1} parent=0 // pred_region
    _
  $region5: #{tpu_custom_call.1} parent=0 // pred_fallthru
    _
  // Predicated region
  $region6: #{tpu_custom_call.1} parent=0 // pred_check
    _
  $region7: #{tpu_custom_call.1} parent=0 // pred_check_branch
    %10 = sbr.rel (0) target = $region9
  $region8: #{tpu_custom_call.1} parent=0 // pred_region
    _
  $region9: #{tpu_custom_call.1} parent=0 // pred_fallthru
    _
  %p12 = scmp.eq.s32.totalorder 0, 0
  // Predicated region
  $region10: #{tpu_custom_call.1} parent=0 // pred_check
    %p13 = pneg %p12
  $region11: #{tpu_custom_call.1} parent=0 // pred_check_branch
    %15 = sbr.rel (%p13) target = $region13
  $region12: #{tpu_custom_call.1} parent=0 // pred_region
    %vm16 = vcmask 523264
    %17 = vst.msk [vmem:[#allocation2] sm:$0xff] %vm16, 0.0
    %18 = vst.msk [vmem:[#allocation2 + $0x8] sm:$0xff] %vm16, 0.0
    %19 = vst.msk [vmem:[#allocation2 + $0x10] sm:$0xff] %vm16, 0.0
    %20 = vst.msk [vmem:[#allocation2 + $0x18] sm:$0xff] %vm16, 0.0
    %21 = vst.msk [vmem:[#allocation2 + $0x20] sm:$0xff] %vm16, 0.0
    %22 = vst.msk [vmem:[#allocation2 + $0x28] sm:$0xff] %vm16, 0.0
    %23 = vst.msk [vmem:[#allocation2 + $0x30] sm:$0xff] %vm16, 0.0
    %24 = vst.msk [vmem:[#allocation2 + $0x38] sm:$0xff] %vm16, 0.0
    %25 = vst.msk [vmem:[#allocation2 + $0x40] sm:$0xff] %vm16, 0.0
    %26 = vst.msk [vmem:[#allocation2 + $0x48] sm:$0xff] %vm16, 0.0
    %27 = vst.msk [vmem:[#allocation2 + $0x50] sm:$0xff] %vm16, 0.0
    %28 = vst.msk [vmem:[#allocation2 + $0x58] sm:$0xff] %vm16, 0.0
    %29 = vst.msk [vmem:[#allocation2 + $0x60] sm:$0xff] %vm16, 0.0
    %30 = vst.msk [vmem:[#allocation2 + $0x68] sm:$0xff] %vm16, 0.0
    %31 = vst.msk [vmem:[#allocation2 + $0x70] sm:$0xff] %vm16, 0.0
    %32 = vst.msk [vmem:[#allocation2 + $0x78] sm:$0xff] %vm16, 0.0
    %33 = vst.msk [vmem:[#allocation2 + $0x80] sm:$0xff] %vm16, 0.0
    %34 = vst.msk [vmem:[#allocation2 + $0x88] sm:$0xff] %vm16, 0.0
    %35 = vst.msk [vmem:[#allocation2 + $0x90] sm:$0xff] %vm16, 0.0
    %36 = vst.msk [vmem:[#allocation2 + $0x98] sm:$0xff] %vm16, 0.0
    %37 = vst.msk [vmem:[#allocation2 + $0xa0] sm:$0xff] %vm16, 0.0
    %38 = vst.msk [vmem:[#allocation2 + $0xa8] sm:$0xff] %vm16, 0.0
    %39 = vst.msk [vmem:[#allocation2 + $0xb0] sm:$0xff] %vm16, 0.0
    %40 = vst.msk [vmem:[#allocation2 + $0xb8] sm:$0xff] %vm16, 0.0
    %41 = vst.msk [vmem:[#allocation2 + $0xc0] sm:$0xff] %vm16, 0.0
    %42 = vst.msk [vmem:[#allocation2 + $0xc8] sm:$0xff] %vm16, 0.0
    %43 = vst.msk [vmem:[#allocation2 + $0xd0] sm:$0xff] %vm16, 0.0
    %44 = vst.msk [vmem:[#allocation2 + $0xd8] sm:$0xff] %vm16, 0.0
    %45 = vst.msk [vmem:[#allocation2 + $0xe0] sm:$0xff] %vm16, 0.0
    %46 = vst.msk [vmem:[#allocation2 + $0xe8] sm:$0xff] %vm16, 0.0
    %47 = vst.msk [vmem:[#allocation2 + $0xf0] sm:$0xff] %vm16, 0.0
    %48 = vst.msk [vmem:[#allocation2 + $0xf8] sm:$0xff] %vm16, 0.0
    %49 = vst.msk [vmem:[#allocation2 + $0x100] sm:$0xff] %vm16, 0.0
    %50 = vst.msk [vmem:[#allocation2 + $0x108] sm:$0xff] %vm16, 0.0
    %51 = vst.msk [vmem:[#allocation2 + $0x110] sm:$0xff] %vm16, 0.0
    %52 = vst.msk [vmem:[#allocation2 + $0x118] sm:$0xff] %vm16, 0.0
    %53 = vst.msk [vmem:[#allocation2 + $0x120] sm:$0xff] %vm16, 0.0
    %54 = vst.msk [vmem:[#allocation2 + $0x128] sm:$0xff] %vm16, 0.0
    %55 = vst.msk [vmem:[#allocation2 + $0x130] sm:$0xff] %vm16, 0.0
    %56 = vst.msk [vmem:[#allocation2 + $0x138] sm:$0xff] %vm16, 0.0
    %57 = vst.msk [vmem:[#allocation2 + $0x140] sm:$0xff] %vm16, 0.0
    %58 = vst.msk [vmem:[#allocation2 + $0x148] sm:$0xff] %vm16, 0.0
    %59 = vst.msk [vmem:[#allocation2 + $0x150] sm:$0xff] %vm16, 0.0
    %60 = vst.msk [vmem:[#allocation2 + $0x158] sm:$0xff] %vm16, 0.0
    %61 = vst.msk [vmem:[#allocation2 + $0x160] sm:$0xff] %vm16, 0.0
    %62 = vst.msk [vmem:[#allocation2 + $0x168] sm:$0xff] %vm16, 0.0
    %63 = vst.msk [vmem:[#allocation2 + $0x170] sm:$0xff] %vm16, 0.0
    %64 = vst.msk [vmem:[#allocation2 + $0x178] sm:$0xff] %vm16, 0.0
    %65 = vst.msk [vmem:[#allocation2 + $0x180] sm:$0xff] %vm16, 0.0
    %66 = vst.msk [vmem:[#allocation2 + $0x188] sm:$0xff] %vm16, 0.0
    %67 = vst.msk [vmem:[#allocation2 + $0x190] sm:$0xff] %vm16, 0.0
    %68 = vst.msk [vmem:[#allocation2 + $0x198] sm:$0xff] %vm16, 0.0
    %69 = vst.msk [vmem:[#allocation2 + $0x1a0] sm:$0xff] %vm16, 0.0
    %70 = vst.msk [vmem:[#allocation2 + $0x1a8] sm:$0xff] %vm16, 0.0
    %71 = vst.msk [vmem:[#allocation2 + $0x1b0] sm:$0xff] %vm16, 0.0
    %72 = vst.msk [vmem:[#allocation2 + $0x1b8] sm:$0xff] %vm16, 0.0
    %73 = vst.msk [vmem:[#allocation2 + $0x1c0] sm:$0xff] %vm16, 0.0
    %74 = vst.msk [vmem:[#allocation2 + $0x1c8] sm:$0xff] %vm16, 0.0
    %75 = vst.msk [vmem:[#allocation2 + $0x1d0] sm:$0xff] %vm16, 0.0
    %76 = vst.msk [vmem:[#allocation2 + $0x1d8] sm:$0xff] %vm16, 0.0
    %77 = vst.msk [vmem:[#allocation2 + $0x1e0] sm:$0xff] %vm16, 0.0
    %78 = vst.msk [vmem:[#allocation2 + $0x1e8] sm:$0xff] %vm16, 0.0
    %79 = vst.msk [vmem:[#allocation2 + $0x1f0] sm:$0xff] %vm16, 0.0
    %80 = vst.msk [vmem:[#allocation2 + $0x1f8] sm:$0xff] %vm16, 0.0
  $region13: #{tpu_custom_call.1} parent=0 // pred_fallthru
    _
  %v81 = vld [vmem:[#allocation2] sm:$0xff]
  %v82 = vld [vmem:[#allocation2 + $0x8] sm:$0xff]
  %v83 = vld [vmem:[#allocation2 + $0x10] sm:$0xff]
  %v84 = vld [vmem:[#allocation2 + $0x18] sm:$0xff]
  %v85 = vld [vmem:[#allocation2 + $0x20] sm:$0xff]
  %v86 = vld [vmem:[#allocation2 + $0x28] sm:$0xff]
  %v87 = vld [vmem:[#allocation2 + $0x30] sm:$0xff]
  %v88 = vld [vmem:[#allocation2 + $0x38] sm:$0xff]
  %v89 = vld [vmem:[#allocation2 + $0x40] sm:$0xff]
  %v90 = vld [vmem:[#allocation2 + $0x48] sm:$0xff]
  %v91 = vld [vmem:[#allocation2 + $0x50] sm:$0xff]
  %v92 = vld [vmem:[#allocation2 + $0x58] sm:$0xff]
  %v93 = vld [vmem:[#allocation2 + $0x60] sm:$0xff]
  %v94 = vld [vmem:[#allocation2 + $0x68] sm:$0xff]
  %v95 = vld [vmem:[#allocation2 + $0x70] sm:$0xff]
  %v96 = vld [vmem:[#allocation2 + $0x78] sm:$0xff]
  %v97 = vld [vmem:[#allocation2 + $0x80] sm:$0xff]
  %v98 = vld [vmem:[#allocation2 + $0x88] sm:$0xff]
  %v99 = vld [vmem:[#allocation2 + $0x90] sm:$0xff]
  %v100 = vld [vmem:[#allocation2 + $0x98] sm:$0xff]
  %v101 = vld [vmem:[#allocation2 + $0xa0] sm:$0xff]
  %v102 = vld [vmem:[#allocation2 + $0xa8] sm:$0xff]
  %v103 = vld [vmem:[#allocation2 + $0xb0] sm:$0xff]
  %v104 = vld [vmem:[#allocation2 + $0xb8] sm:$0xff]
  %v105 = vld [vmem:[#allocation2 + $0xc0] sm:$0xff]
  %v106 = vld [vmem:[#allocation2 + $0xc8] sm:$0xff]
  %v107 = vld [vmem:[#allocation2 + $0xd0] sm:$0xff]
  %v108 = vld [vmem:[#allocation2 + $0xd8] sm:$0xff]
  %v109 = vld [vmem:[#allocation2 + $0xe0] sm:$0xff]
  %v110 = vld [vmem:[#allocation2 + $0xe8] sm:$0xff]
  %v111 = vld [vmem:[#allocation2 + $0xf0] sm:$0xff]
  %v112 = vld [vmem:[#allocation2 + $0xf8] sm:$0xff]
  %v113 = vld [vmem:[#allocation2 + $0x100] sm:$0xff]
  %v114 = vld [vmem:[#allocation2 + $0x108] sm:$0xff]
  %v115 = vld [vmem:[#allocation2 + $0x110] sm:$0xff]
  %v116 = vld [vmem:[#allocation2 + $0x118] sm:$0xff]
  %v117 = vld [vmem:[#allocation2 + $0x120] sm:$0xff]
  %v118 = vld [vmem:[#allocation2 + $0x128] sm:$0xff]
  %v119 = vld [vmem:[#allocation2 + $0x130] sm:$0xff]
  %v120 = vld [vmem:[#allocation2 + $0x138] sm:$0xff]
  %v121 = vld [vmem:[#allocation2 + $0x140] sm:$0xff]
  %v122 = vld [vmem:[#allocation2 + $0x148] sm:$0xff]
  %v123 = vld [vmem:[#allocation2 + $0x150] sm:$0xff]
  %v124 = vld [vmem:[#allocation2 + $0x158] sm:$0xff]
  %v125 = vld [vmem:[#allocation2 + $0x160] sm:$0xff]
  %v126 = vld [vmem:[#allocation2 + $0x168] sm:$0xff]
  %v127 = vld [vmem:[#allocation2 + $0x170] sm:$0xff]
  %v128 = vld [vmem:[#allocation2 + $0x178] sm:$0xff]
  %v129 = vld [vmem:[#allocation2 + $0x180] sm:$0xff]
  %v130 = vld [vmem:[#allocation2 + $0x188] sm:$0xff]
  %v131 = vld [vmem:[#allocation2 + $0x190] sm:$0xff]
  %v132 = vld [vmem:[#allocation2 + $0x198] sm:$0xff]
  %v133 = vld [vmem:[#allocation2 + $0x1a0] sm:$0xff]
  %v134 = vld [vmem:[#allocation2 + $0x1a8] sm:$0xff]
  %v135 = vld [vmem:[#allocation2 + $0x1b0] sm:$0xff]
  %v136 = vld [vmem:[#allocation2 + $0x1b8] sm:$0xff]
  %v137 = vld [vmem:[#allocation2 + $0x1c0] sm:$0xff]
  %v138 = vld [vmem:[#allocation2 + $0x1c8] sm:$0xff]
  %v139 = vld [vmem:[#allocation2 + $0x1d0] sm:$0xff]
  %v140 = vld [vmem:[#allocation2 + $0x1d8] sm:$0xff]
  %v141 = vld [vmem:[#allocation2 + $0x1e0] sm:$0xff]
  %v142 = vld [vmem:[#allocation2 + $0x1e8] sm:$0xff]
  %v143 = vld [vmem:[#allocation2 + $0x1f0] sm:$0xff]
  %v144 = vld [vmem:[#allocation2 + $0x1f8] sm:$0xff]
  %v145 = vld [vmem:[%s0] sm:$0xf]
  %v146 = vld [vmem:[%s0 + $0x4] sm:$0xf]
  %v147 = vld [vmem:[%s0 + $0x8] sm:$0xf]
  %v148 = vld [vmem:[%s0 + $0xc] sm:$0xf]
  %v149 = vld [vmem:[%s0 + $0x10] sm:$0xf]
  %v150 = vld [vmem:[%s0 + $0x14] sm:$0xf]
  %v151 = vld [vmem:[%s0 + $0x18] sm:$0xf]
  %v152 = vld [vmem:[%s0 + $0x1c] sm:$0xf]
  %v153 = vld [vmem:[%s0 + $0x20] sm:$0xf]
  %v154 = vld [vmem:[%s0 + $0x24] sm:$0xf]
  %v155 = vld [vmem:[%s0 + $0x28] sm:$0xf]
  %v156 = vld [vmem:[%s0 + $0x2c] sm:$0xf]
  %v157 = vld [vmem:[%s0 + $0x30] sm:$0xf]
  %v158 = vld [vmem:[%s0 + $0x34] sm:$0xf]
  %v159 = vld [vmem:[%s0 + $0x38] sm:$0xf]
  %v160 = vld [vmem:[%s0 + $0x3c] sm:$0xf]
  %v161 = vld [vmem:[%s0 + $0x40] sm:$0xf]
  %v162 = vld [vmem:[%s0 + $0x44] sm:$0xf]
  %v163 = vld [vmem:[%s0 + $0x48] sm:$0xf]
  %v164 = vld [vmem:[%s0 + $0x4c] sm:$0xf]
  %v165 = vld [vmem:[%s0 + $0x50] sm:$0xf]
  %v166 = vld [vmem:[%s0 + $0x54] sm:$0xf]
  %v167 = vld [vmem:[%s0 + $0x58] sm:$0xf]
  %v168 = vld [vmem:[%s0 + $0x5c] sm:$0xf]
  %v169 = vld [vmem:[%s0 + $0x60] sm:$0xf]
  %v170 = vld [vmem:[%s0 + $0x64] sm:$0xf]
  %v171 = vld [vmem:[%s0 + $0x68] sm:$0xf]
  %v172 = vld [vmem:[%s0 + $0x6c] sm:$0xf]
  %v173 = vld [vmem:[%s0 + $0x70] sm:$0xf]
  %v174 = vld [vmem:[%s0 + $0x74] sm:$0xf]
  %v175 = vld [vmem:[%s0 + $0x78] sm:$0xf]
  %v176 = vld [vmem:[%s0 + $0x7c] sm:$0xf]
  %v177 = vld [vmem:[%s0 + $0x80] sm:$0xf]
  %v178 = vld [vmem:[%s0 + $0x84] sm:$0xf]
  %v179 = vld [vmem:[%s0 + $0x88] sm:$0xf]
  %v180 = vld [vmem:[%s0 + $0x8c] sm:$0xf]
  %v181 = vld [vmem:[%s0 + $0x90] sm:$0xf]
  %v182 = vld [vmem:[%s0 + $0x94] sm:$0xf]
  %v183 = vld [vmem:[%s0 + $0x98] sm:$0xf]
  %v184 = vld [vmem:[%s0 + $0x9c] sm:$0xf]
  %v185 = vld [vmem:[%s0 + $0xa0] sm:$0xf]
  %v186 = vld [vmem:[%s0 + $0xa4] sm:$0xf]
  %v187 = vld [vmem:[%s0 + $0xa8] sm:$0xf]
  %v188 = vld [vmem:[%s0 + $0xac] sm:$0xf]
  %v189 = vld [vmem:[%s0 + $0xb0] sm:$0xf]
  %v190 = vld [vmem:[%s0 + $0xb4] sm:$0xf]
  %v191 = vld [vmem:[%s0 + $0xb8] sm:$0xf]
  %v192 = vld [vmem:[%s0 + $0xbc] sm:$0xf]
  %v193 = vld [vmem:[%s0 + $0xc0] sm:$0xf]
  %v194 = vld [vmem:[%s0 + $0xc4] sm:$0xf]
  %v195 = vld [vmem:[%s0 + $0xc8] sm:$0xf]
  %v196 = vld [vmem:[%s0 + $0xcc] sm:$0xf]
  %v197 = vld [vmem:[%s0 + $0xd0] sm:$0xf]
  %v198 = vld [vmem:[%s0 + $0xd4] sm:$0xf]
  %v199 = vld [vmem:[%s0 + $0xd8] sm:$0xf]
  %v200 = vld [vmem:[%s0 + $0xdc] sm:$0xf]
  %v201 = vld [vmem:[%s0 + $0xe0] sm:$0xf]
  %v202 = vld [vmem:[%s0 + $0xe4] sm:$0xf]
  %v203 = vld [vmem:[%s0 + $0xe8] sm:$0xf]
  %v204 = vld [vmem:[%s0 + $0xec] sm:$0xf]
  %v205 = vld [vmem:[%s0 + $0xf0] sm:$0xf]
  %v206 = vld [vmem:[%s0 + $0xf4] sm:$0xf]
  %v207 = vld [vmem:[%s0 + $0xf8] sm:$0xf]
  %v208 = vld [vmem:[%s0 + $0xfc] sm:$0xf]
  %v209 = vld [vmem:[%s1] sm:$0xf]
  %v210 = vld [vmem:[%s1 + $0x4] sm:$0xf]
  %v211 = vld [vmem:[%s1 + $0x8] sm:$0xf]
  %v212 = vld [vmem:[%s1 + $0xc] sm:$0x3]
  %v277 = vunpack.c.l.b16 %v145
  %v278 = vunpack.c.l.b16 %v146
  %v279 = vunpack.c.l.b16 %v147
  %v280 = vunpack.c.l.b16 %v148
  %v281 = vunpack.c.l.b16 %v149
  %v282 = vunpack.c.l.b16 %v150
  %v283 = vunpack.c.l.b16 %v151
  %v284 = vunpack.c.l.b16 %v152
  %v285 = vunpack.c.l.b16 %v153
  %v286 = vunpack.c.l.b16 %v154
  %v287 = vunpack.c.l.b16 %v155
  %v288 = vunpack.c.l.b16 %v156
  %v289 = vunpack.c.l.b16 %v157
  %v290 = vunpack.c.l.b16 %v158
  %v291 = vunpack.c.l.b16 %v159
  %v292 = vunpack.c.l.b16 %v160
  %v293 = vunpack.c.l.b16 %v161
  %v294 = vunpack.c.l.b16 %v162
  %v295 = vunpack.c.l.b16 %v163
  %v296 = vunpack.c.l.b16 %v164
  %v297 = vunpack.c.l.b16 %v165
  %v298 = vunpack.c.l.b16 %v166
  %v299 = vunpack.c.l.b16 %v167
  %v300 = vunpack.c.l.b16 %v168
  %v301 = vunpack.c.l.b16 %v169
  %v302 = vunpack.c.l.b16 %v170
  %v303 = vunpack.c.l.b16 %v171
  %v304 = vunpack.c.l.b16 %v172
  %v305 = vunpack.c.l.b16 %v173
  %v306 = vunpack.c.l.b16 %v174
  %v307 = vunpack.c.l.b16 %v175
  %v308 = vunpack.c.l.b16 %v176
  %v309 = vunpack.c.l.b16 %v177
  %v310 = vunpack.c.l.b16 %v178
  %v311 = vunpack.c.l.b16 %v179
  %v312 = vunpack.c.l.b16 %v180
  %v313 = vunpack.c.l.b16 %v181
  %v314 = vunpack.c.l.b16 %v182
  %v315 = vunpack.c.l.b16 %v183
  %v316 = vunpack.c.l.b16 %v184
  %v317 = vunpack.c.l.b16 %v185
  %v318 = vunpack.c.l.b16 %v186
  %v319 = vunpack.c.l.b16 %v187
  %v320 = vunpack.c.l.b16 %v188
  %v321 = vunpack.c.l.b16 %v189
  %v322 = vunpack.c.l.b16 %v190
  %v323 = vunpack.c.l.b16 %v191
  %v324 = vunpack.c.l.b16 %v192
  %v325 = vunpack.c.l.b16 %v193
  %v326 = vunpack.c.l.b16 %v194
  %v327 = vunpack.c.l.b16 %v195
  %v328 = vunpack.c.l.b16 %v196
  %v329 = vunpack.c.l.b16 %v197
  %v330 = vunpack.c.l.b16 %v198
  %v331 = vunpack.c.l.b16 %v199
  %v332 = vunpack.c.l.b16 %v200
  %v333 = vunpack.c.l.b16 %v201
  %v334 = vunpack.c.l.b16 %v202
  %v335 = vunpack.c.l.b16 %v203
  %v336 = vunpack.c.l.b16 %v204
  %v337 = vunpack.c.l.b16 %v205
  %v338 = vunpack.c.l.b16 %v206
  %v339 = vunpack.c.l.b16 %v207
  %v340 = vunpack.c.l.b16 %v208
  %v341 = vpack.c.b16 %v278, %v277
  %v342 = vpack.c.b16 %v280, %v279
  %v343 = vpack.c.b16 %v282, %v281
  %v344 = vpack.c.b16 %v284, %v283
  %v345 = vpack.c.b16 %v286, %v285
  %v346 = vpack.c.b16 %v288, %v287
  %v347 = vpack.c.b16 %v290, %v289
  %v348 = vpack.c.b16 %v292, %v291
  %v349 = vpack.c.b16 %v294, %v293
  %v350 = vpack.c.b16 %v296, %v295
  %v351 = vpack.c.b16 %v298, %v297
  %v352 = vpack.c.b16 %v300, %v299
  %v353 = vpack.c.b16 %v302, %v301
  %v354 = vpack.c.b16 %v304, %v303
  %v355 = vpack.c.b16 %v306, %v305
  %v356 = vpack.c.b16 %v308, %v307
  %v357 = vpack.c.b16 %v310, %v309
  %v358 = vpack.c.b16 %v312, %v311
  %v359 = vpack.c.b16 %v314, %v313
  %v360 = vpack.c.b16 %v316, %v315
  %v361 = vpack.c.b16 %v318, %v317
  %v362 = vpack.c.b16 %v320, %v319
  %v363 = vpack.c.b16 %v322, %v321
  %v364 = vpack.c.b16 %v324, %v323
  %v365 = vpack.c.b16 %v326, %v325
  %v366 = vpack.c.b16 %v328, %v327
  %v367 = vpack.c.b16 %v330, %v329
  %v368 = vpack.c.b16 %v332, %v331
  %v369 = vpack.c.b16 %v334, %v333
  %v370 = vpack.c.b16 %v336, %v335
  %v371 = vpack.c.b16 %v338, %v337
  %v372 = vpack.c.b16 %v340, %v339
  %v377 = vunpack.c.l.b16 %v209
  %v378 = vunpack.c.l.b16 %v210
  %v379 = vunpack.c.l.b16 %v211
  %v380 = vunpack.c.l.b16 %v212
  %v381 = vpack.c.b16 %v378, %v377
  %v382 = vpack.c.b16 %v380, %v379
  %vm384 = vcmask 220160
  %v386 = vsel %vm384, %v341, 0
  %v389 = vsel %vm384, %v342, 0
  %v392 = vsel %vm384, %v343, 0
  %v395 = vsel %vm384, %v344, 0
  %v398 = vsel %vm384, %v345, 0
  %v401 = vsel %vm384, %v346, 0
  %v404 = vsel %vm384, %v347, 0
  %v407 = vsel %vm384, %v348, 0
  %v410 = vsel %vm384, %v349, 0
  %v413 = vsel %vm384, %v350, 0
  %v416 = vsel %vm384, %v351, 0
  %v419 = vsel %vm384, %v352, 0
  %v422 = vsel %vm384, %v353, 0
  %v425 = vsel %vm384, %v354, 0
  %v428 = vsel %vm384, %v355, 0
  %v431 = vsel %vm384, %v356, 0
  %v434 = vsel %vm384, %v357, 0
  %v437 = vsel %vm384, %v358, 0
  %v440 = vsel %vm384, %v359, 0
  %v443 = vsel %vm384, %v360, 0
  %v446 = vsel %vm384, %v361, 0
  %v449 = vsel %vm384, %v362, 0
  %v452 = vsel %vm384, %v363, 0
  %v455 = vsel %vm384, %v364, 0
  %v458 = vsel %vm384, %v365, 0
  %v461 = vsel %vm384, %v366, 0
  %v464 = vsel %vm384, %v367, 0
  %v467 = vsel %vm384, %v368, 0
  %v470 = vsel %vm384, %v369, 0
  %v473 = vsel %vm384, %v370, 0
  %v476 = vsel %vm384, %v371, 0
  %v479 = vsel %vm384, %v372, 0
  %vm481 = vcmask 1044480
  %vm482 = vcmask 1045504
  %v483 = vsel %vm481, 4294967295, 65535
  %v484 = vsel %vm482, %v483, 0
  %v486 = vand.u32 %v382, %v484
  %488 = vmatpush.bf16.msra.mxu0 0
  %489 = vmatpush.bf16.msra.mxu0 0
  %490 = vmatpush.bf16.msra.mxu0 0
  %491 = vmatpush.bf16.msra.mxu0 0
  %492 = vmatpush.bf16.msra.mxu0 0
  %493 = vmatpush.bf16.msra.mxu0 0
  %494 = vmatpush.bf16.msra.mxu0 %v486
  %495 = vmatpush.bf16.msra.mxu0 %v381
  %496 = vmatmul.bf16.gmra.mxu0 %v386
  %v497 = vpop.f32.mrf.mxu0
  %v498 = vadd.f32 0.0, %v497
  %v499 = vpop.f32.mrf.mxu0
  %v500 = vadd.f32 0.0, %v499
  %501 = vmatmul.bf16.gmra.mxu0 %v389
  %v502 = vpop.f32.mrf.mxu0
  %v503 = vadd.f32 0.0, %v502
  %v504 = vpop.f32.mrf.mxu0
  %v505 = vadd.f32 0.0, %v504
  %506 = vmatmul.bf16.gmra.mxu0 %v392
  %v507 = vpop.f32.mrf.mxu0
  %v508 = vadd.f32 0.0, %v507
  %v509 = vpop.f32.mrf.mxu0
  %v510 = vadd.f32 0.0, %v509
  %511 = vmatmul.bf16.gmra.mxu0 %v395
  %v512 = vpop.f32.mrf.mxu0
  %v513 = vadd.f32 0.0, %v512
  %v514 = vpop.f32.mrf.mxu0
  %v515 = vadd.f32 0.0, %v514
  %516 = vmatmul.bf16.gmra.mxu0 %v398
  %v517 = vpop.f32.mrf.mxu0
  %v518 = vadd.f32 0.0, %v517
  %v519 = vpop.f32.mrf.mxu0
  %v520 = vadd.f32 0.0, %v519
  %521 = vmatmul.bf16.gmra.mxu0 %v401
  %v522 = vpop.f32.mrf.mxu0
  %v523 = vadd.f32 0.0, %v522
  %v524 = vpop.f32.mrf.mxu0
  %v525 = vadd.f32 0.0, %v524
  %526 = vmatmul.bf16.gmra.mxu0 %v404
  %v527 = vpop.f32.mrf.mxu0
  %v528 = vadd.f32 0.0, %v527
  %v529 = vpop.f32.mrf.mxu0
  %v530 = vadd.f32 0.0, %v529
  %531 = vmatmul.bf16.gmra.mxu0 %v407
  %v532 = vpop.f32.mrf.mxu0
  %v533 = vadd.f32 0.0, %v532
  %v534 = vpop.f32.mrf.mxu0
  %v535 = vadd.f32 0.0, %v534
  %536 = vmatmul.bf16.gmra.mxu0 %v410
  %v537 = vpop.f32.mrf.mxu0
  %v538 = vadd.f32 0.0, %v537
  %v539 = vpop.f32.mrf.mxu0
  %v540 = vadd.f32 0.0, %v539
  %541 = vmatmul.bf16.gmra.mxu0 %v413
  %v542 = vpop.f32.mrf.mxu0
  %v543 = vadd.f32 0.0, %v542
  %v544 = vpop.f32.mrf.mxu0
  %v545 = vadd.f32 0.0, %v544
  %546 = vmatmul.bf16.gmra.mxu0 %v416
  %v547 = vpop.f32.mrf.mxu0
  %v548 = vadd.f32 0.0, %v547
  %v549 = vpop.f32.mrf.mxu0
  %v550 = vadd.f32 0.0, %v549
  %551 = vmatmul.bf16.gmra.mxu0 %v419
  %v552 = vpop.f32.mrf.mxu0
  %v553 = vadd.f32 0.0, %v552
  %v554 = vpop.f32.mrf.mxu0
  %v555 = vadd.f32 0.0, %v554
  %556 = vmatmul.bf16.gmra.mxu0 %v422
  %v557 = vpop.f32.mrf.mxu0
  %v558 = vadd.f32 0.0, %v557
  %v559 = vpop.f32.mrf.mxu0
  %v560 = vadd.f32 0.0, %v559
  %561 = vmatmul.bf16.gmra.mxu0 %v425
  %v562 = vpop.f32.mrf.mxu0
  %v563 = vadd.f32 0.0, %v562
  %v564 = vpop.f32.mrf.mxu0
  %v565 = vadd.f32 0.0, %v564
  %566 = vmatmul.bf16.gmra.mxu0 %v428
  %v567 = vpop.f32.mrf.mxu0
  %v568 = vadd.f32 0.0, %v567
  %v569 = vpop.f32.mrf.mxu0
  %v570 = vadd.f32 0.0, %v569
  %571 = vmatmul.bf16.gmra.mxu0 %v431
  %v572 = vpop.f32.mrf.mxu0
  %v573 = vadd.f32 0.0, %v572
  %v574 = vpop.f32.mrf.mxu0
  %v575 = vadd.f32 0.0, %v574
  %576 = vmatmul.bf16.gmra.mxu0 %v434
  %v577 = vpop.f32.mrf.mxu0
  %v578 = vadd.f32 0.0, %v577
  %v579 = vpop.f32.mrf.mxu0
  %v580 = vadd.f32 0.0, %v579
  %581 = vmatmul.bf16.gmra.mxu0 %v437
  %v582 = vpop.f32.mrf.mxu0
  %v583 = vadd.f32 0.0, %v582
  %v584 = vpop.f32.mrf.mxu0
  %v585 = vadd.f32 0.0, %v584
  %586 = vmatmul.bf16.gmra.mxu0 %v440
  %v587 = vpop.f32.mrf.mxu0
  %v588 = vadd.f32 0.0, %v587
  %v589 = vpop.f32.mrf.mxu0
  %v590 = vadd.f32 0.0, %v589
  %591 = vmatmul.bf16.gmra.mxu0 %v443
  %v592 = vpop.f32.mrf.mxu0
  %v593 = vadd.f32 0.0, %v592
  %v594 = vpop.f32.mrf.mxu0
  %v595 = vadd.f32 0.0, %v594
  %596 = vmatmul.bf16.gmra.mxu0 %v446
  %v597 = vpop.f32.mrf.mxu0
  %v598 = vadd.f32 0.0, %v597
  %v599 = vpop.f32.mrf.mxu0
  %v600 = vadd.f32 0.0, %v599
  %601 = vmatmul.bf16.gmra.mxu0 %v449
  %v602 = vpop.f32.mrf.mxu0
  %v603 = vadd.f32 0.0, %v602
  %v604 = vpop.f32.mrf.mxu0
  %v605 = vadd.f32 0.0, %v604
  %606 = vmatmul.bf16.gmra.mxu0 %v452
  %v607 = vpop.f32.mrf.mxu0
  %v608 = vadd.f32 0.0, %v607
  %v609 = vpop.f32.mrf.mxu0
  %v610 = vadd.f32 0.0, %v609
  %611 = vmatmul.bf16.gmra.mxu0 %v455
  %v612 = vpop.f32.mrf.mxu0
  %v613 = vadd.f32 0.0, %v612
  %v614 = vpop.f32.mrf.mxu0
  %v615 = vadd.f32 0.0, %v614
  %616 = vmatmul.bf16.gmra.mxu0 %v458
  %v617 = vpop.f32.mrf.mxu0
  %v618 = vadd.f32 0.0, %v617
  %v619 = vpop.f32.mrf.mxu0
  %v620 = vadd.f32 0.0, %v619
  %621 = vmatmul.bf16.gmra.mxu0 %v461
  %v622 = vpop.f32.mrf.mxu0
  %v623 = vadd.f32 0.0, %v622
  %v624 = vpop.f32.mrf.mxu0
  %v625 = vadd.f32 0.0, %v624
  %626 = vmatmul.bf16.gmra.mxu0 %v464
  %v627 = vpop.f32.mrf.mxu0
  %v628 = vadd.f32 0.0, %v627
  %v629 = vpop.f32.mrf.mxu0
  %v630 = vadd.f32 0.0, %v629
  %631 = vmatmul.bf16.gmra.mxu0 %v467
  %v632 = vpop.f32.mrf.mxu0
  %v633 = vadd.f32 0.0, %v632
  %v634 = vpop.f32.mrf.mxu0
  %v635 = vadd.f32 0.0, %v634
  %636 = vmatmul.bf16.gmra.mxu0 %v470
  %v637 = vpop.f32.mrf.mxu0
  %v638 = vadd.f32 0.0, %v637
  %v639 = vpop.f32.mrf.mxu0
  %v640 = vadd.f32 0.0, %v639
  %641 = vmatmul.bf16.gmra.mxu0 %v473
  %v642 = vpop.f32.mrf.mxu0
  %v643 = vadd.f32 0.0, %v642
  %v644 = vpop.f32.mrf.mxu0
  %v645 = vadd.f32 0.0, %v644
  %646 = vmatmul.bf16.gmra.mxu0 %v476
  %v647 = vpop.f32.mrf.mxu0
  %v648 = vadd.f32 0.0, %v647
  %v649 = vpop.f32.mrf.mxu0
  %v650 = vadd.f32 0.0, %v649
  %651 = vmatmul.bf16.gmra.mxu0 %v479
  %v652 = vpop.f32.mrf.mxu0
  %v653 = vadd.f32 0.0, %v652
  %v654 = vpop.f32.mrf.mxu0
  %v655 = vadd.f32 0.0, %v654
  %656 = vdwg.mxu0
  %v657 = vadd.f32 %v81, %v498
  %v658 = vadd.f32 %v82, %v500
  %v659 = vadd.f32 %v83, %v503
  %v660 = vadd.f32 %v84, %v505
  %v661 = vadd.f32 %v85, %v508
  %v662 = vadd.f32 %v86, %v510
  %v663 = vadd.f32 %v87, %v513
  %v664 = vadd.f32 %v88, %v515
  %v665 = vadd.f32 %v89, %v518
  %v666 = vadd.f32 %v90, %v520
  %v667 = vadd.f32 %v91, %v523
  %v668 = vadd.f32 %v92, %v525
  %v669 = vadd.f32 %v93, %v528
  %v670 = vadd.f32 %v94, %v530
  %v671 = vadd.f32 %v95, %v533
  %v672 = vadd.f32 %v96, %v535
  %v673 = vadd.f32 %v97, %v538
  %v674 = vadd.f32 %v98, %v540
  %v675 = vadd.f32 %v99, %v543
  %v676 = vadd.f32 %v100, %v545
  %v677 = vadd.f32 %v101, %v548
  %v678 = vadd.f32 %v102, %v550
  %v679 = vadd.f32 %v103, %v553
  %v680 = vadd.f32 %v104, %v555
  %v681 = vadd.f32 %v105, %v558
  %v682 = vadd.f32 %v106, %v560
  %v683 = vadd.f32 %v107, %v563
  %v684 = vadd.f32 %v108, %v565
  %v685 = vadd.f32 %v109, %v568
  %v686 = vadd.f32 %v110, %v570
  %v687 = vadd.f32 %v111, %v573
  %v688 = vadd.f32 %v112, %v575
  %v689 = vadd.f32 %v113, %v578
  %v690 = vadd.f32 %v114, %v580
  %v691 = vadd.f32 %v115, %v583
  %v692 = vadd.f32 %v116, %v585
  %v693 = vadd.f32 %v117, %v588
  %v694 = vadd.f32 %v118, %v590
  %v695 = vadd.f32 %v119, %v593
  %v696 = vadd.f32 %v120, %v595
  %v697 = vadd.f32 %v121, %v598
  %v698 = vadd.f32 %v122, %v600
  %v699 = vadd.f32 %v123, %v603
  %v700 = vadd.f32 %v124, %v605
  %v701 = vadd.f32 %v125, %v608
  %v702 = vadd.f32 %v126, %v610
  %v703 = vadd.f32 %v127, %v613
  %v704 = vadd.f32 %v128, %v615
  %v705 = vadd.f32 %v129, %v618
  %v706 = vadd.f32 %v130, %v620
  %v707 = vadd.f32 %v131, %v623
  %v708 = vadd.f32 %v132, %v625
  %v709 = vadd.f32 %v133, %v628
  %v710 = vadd.f32 %v134, %v630
  %v711 = vadd.f32 %v135, %v633
  %v712 = vadd.f32 %v136, %v635
  %v713 = vadd.f32 %v137, %v638
  %v714 = vadd.f32 %v138, %v640
  %v715 = vadd.f32 %v139, %v643
  %v716 = vadd.f32 %v140, %v645
  %v717 = vadd.f32 %v141, %v648
  %v718 = vadd.f32 %v142, %v650
  %v719 = vadd.f32 %v143, %v653
  %v720 = vadd.f32 %v144, %v655
  %vm721 = vcmask 523264
  %722 = vst.msk [vmem:[#allocation2] sm:$0xff] %vm721, %v657
  %723 = vst.msk [vmem:[#allocation2 + $0x8] sm:$0xff] %vm721, %v658
  %724 = vst.msk [vmem:[#allocation2 + $0x10] sm:$0xff] %vm721, %v659
  %725 = vst.msk [vmem:[#allocation2 + $0x18] sm:$0xff] %vm721, %v660
  %726 = vst.msk [vmem:[#allocation2 + $0x20] sm:$0xff] %vm721, %v661
  %727 = vst.msk [vmem:[#allocation2 + $0x28] sm:$0xff] %vm721, %v662
  %728 = vst.msk [vmem:[#allocation2 + $0x30] sm:$0xff] %vm721, %v663
  %729 = vst.msk [vmem:[#allocation2 + $0x38] sm:$0xff] %vm721, %v664
  %730 = vst.msk [vmem:[#allocation2 + $0x40] sm:$0xff] %vm721, %v665
  %731 = vst.msk [vmem:[#allocation2 + $0x48] sm:$0xff] %vm721, %v666
  %732 = vst.msk [vmem:[#allocation2 + $0x50] sm:$0xff] %vm721, %v667
  %733 = vst.msk [vmem:[#allocation2 + $0x58] sm:$0xff] %vm721, %v668
  %734 = vst.msk [vmem:[#allocation2 + $0x60] sm:$0xff] %vm721, %v669
  %735 = vst.msk [vmem:[#allocation2 + $0x68] sm:$0xff] %vm721, %v670
  %736 = vst.msk [vmem:[#allocation2 + $0x70] sm:$0xff] %vm721, %v671
  %737 = vst.msk [vmem:[#allocation2 + $0x78] sm:$0xff] %vm721, %v672
  %738 = vst.msk [vmem:[#allocation2 + $0x80] sm:$0xff] %vm721, %v673
  %739 = vst.msk [vmem:[#allocation2 + $0x88] sm:$0xff] %vm721, %v674
  %740 = vst.msk [vmem:[#allocation2 + $0x90] sm:$0xff] %vm721, %v675
  %741 = vst.msk [vmem:[#allocation2 + $0x98] sm:$0xff] %vm721, %v676
  %742 = vst.msk [vmem:[#allocation2 + $0xa0] sm:$0xff] %vm721, %v677
  %743 = vst.msk [vmem:[#allocation2 + $0xa8] sm:$0xff] %vm721, %v678
  %744 = vst.msk [vmem:[#allocation2 + $0xb0] sm:$0xff] %vm721, %v679
  %745 = vst.msk [vmem:[#allocation2 + $0xb8] sm:$0xff] %vm721, %v680
  %746 = vst.msk [vmem:[#allocation2 + $0xc0] sm:$0xff] %vm721, %v681
  %747 = vst.msk [vmem:[#allocation2 + $0xc8] sm:$0xff] %vm721, %v682
  %748 = vst.msk [vmem:[#allocation2 + $0xd0] sm:$0xff] %vm721, %v683
  %749 = vst.msk [vmem:[#allocation2 + $0xd8] sm:$0xff] %vm721, %v684
  %750 = vst.msk [vmem:[#allocation2 + $0xe0] sm:$0xff] %vm721, %v685
  %751 = vst.msk [vmem:[#allocation2 + $0xe8] sm:$0xff] %vm721, %v686
  %752 = vst.msk [vmem:[#allocation2 + $0xf0] sm:$0xff] %vm721, %v687
  %753 = vst.msk [vmem:[#allocation2 + $0xf8] sm:$0xff] %vm721, %v688
  %754 = vst.msk [vmem:[#allocation2 + $0x100] sm:$0xff] %vm721, %v689
  %755 = vst.msk [vmem:[#allocation2 + $0x108] sm:$0xff] %vm721, %v690
  %756 = vst.msk [vmem:[#allocation2 + $0x110] sm:$0xff] %vm721, %v691
  %757 = vst.msk [vmem:[#allocation2 + $0x118] sm:$0xff] %vm721, %v692
  %758 = vst.msk [vmem:[#allocation2 + $0x120] sm:$0xff] %vm721, %v693
  %759 = vst.msk [vmem:[#allocation2 + $0x128] sm:$0xff] %vm721, %v694
  %760 = vst.msk [vmem:[#allocation2 + $0x130] sm:$0xff] %vm721, %v695
  %761 = vst.msk [vmem:[#allocation2 + $0x138] sm:$0xff] %vm721, %v696
  %762 = vst.msk [vmem:[#allocation2 + $0x140] sm:$0xff] %vm721, %v697
  %763 = vst.msk [vmem:[#allocation2 + $0x148] sm:$0xff] %vm721, %v698
  %764 = vst.msk [vmem:[#allocation2 + $0x150] sm:$0xff] %vm721, %v699
  %765 = vst.msk [vmem:[#allocation2 + $0x158] sm:$0xff] %vm721, %v700
  %766 = vst.msk [vmem:[#allocation2 + $0x160] sm:$0xff] %vm721, %v701
  %767 = vst.msk [vmem:[#allocation2 + $0x168] sm:$0xff] %vm721, %v702
  %768 = vst.msk [vmem:[#allocation2 + $0x170] sm:$0xff] %vm721, %v703
  %769 = vst.msk [vmem:[#allocation2 + $0x178] sm:$0xff] %vm721, %v704
  %770 = vst.msk [vmem:[#allocation2 + $0x180] sm:$0xff] %vm721, %v705
  %771 = vst.msk [vmem:[#allocation2 + $0x188] sm:$0xff] %vm721, %v706
  %772 = vst.msk [vmem:[#allocation2 + $0x190] sm:$0xff] %vm721, %v707
  %773 = vst.msk [vmem:[#allocation2 + $0x198] sm:$0xff] %vm721, %v708
  %774 = vst.msk [vmem:[#allocation2 + $0x1a0] sm:$0xff] %vm721, %v709
  %775 = vst.msk [vmem:[#allocation2 + $0x1a8] sm:$0xff] %vm721, %v710
  %776 = vst.msk [vmem:[#allocation2 + $0x1b0] sm:$0xff] %vm721, %v711
  %777 = vst.msk [vmem:[#allocation2 + $0x1b8] sm:$0xff] %vm721, %v712
  %778 = vst.msk [vmem:[#allocation2 + $0x1c0] sm:$0xff] %vm721, %v713
  %779 = vst.msk [vmem:[#allocation2 + $0x1c8] sm:$0xff] %vm721, %v714
  %780 = vst.msk [vmem:[#allocation2 + $0x1d0] sm:$0xff] %vm721, %v715
  %781 = vst.msk [vmem:[#allocation2 + $0x1d8] sm:$0xff] %vm721, %v716
  %782 = vst.msk [vmem:[#allocation2 + $0x1e0] sm:$0xff] %vm721, %v717
  %783 = vst.msk [vmem:[#allocation2 + $0x1e8] sm:$0xff] %vm721, %v718
  %784 = vst.msk [vmem:[#allocation2 + $0x1f0] sm:$0xff] %vm721, %v719
  %785 = vst.msk [vmem:[#allocation2 + $0x1f8] sm:$0xff] %vm721, %v720
  // Predicated region
  $region14: #{tpu_custom_call.1} parent=0 // pred_check
    %p786 = pneg %p12
  $region15: #{tpu_custom_call.1} parent=0 // pred_check_branch
    %788 = sbr.rel (%p786) target = $region17
  $region16: #{tpu_custom_call.1} parent=0 // pred_region
    %v789 = vld [vmem:[#allocation2] sm:$0xff]
    %v790 = vld [vmem:[#allocation2 + $0x8] sm:$0xff]
    %v791 = vld [vmem:[#allocation2 + $0x10] sm:$0xff]
    %v792 = vld [vmem:[#allocation2 + $0x18] sm:$0xff]
    %v793 = vld [vmem:[#allocation2 + $0x20] sm:$0xff]
    %v794 = vld [vmem:[#allocation2 + $0x28] sm:$0xff]
    %v795 = vld [vmem:[#allocation2 + $0x30] sm:$0xff]
    %v796 = vld [vmem:[#allocation2 + $0x38] sm:$0xff]
    %v797 = vld [vmem:[#allocation2 + $0x40] sm:$0xff]
    %v798 = vld [vmem:[#allocation2 + $0x48] sm:$0xff]
    %v799 = vld [vmem:[#allocation2 + $0x50] sm:$0xff]
    %v800 = vld [vmem:[#allocation2 + $0x58] sm:$0xff]
    %v801 = vld [vmem:[#allocation2 + $0x60] sm:$0xff]
    %v802 = vld [vmem:[#allocation2 + $0x68] sm:$0xff]
    %v803 = vld [vmem:[#allocation2 + $0x70] sm:$0xff]
    %v804 = vld [vmem:[#allocation2 + $0x78] sm:$0xff]
    %v805 = vld [vmem:[#allocation2 + $0x80] sm:$0xff]
    %v806 = vld [vmem:[#allocation2 + $0x88] sm:$0xff]
    %v807 = vld [vmem:[#allocation2 + $0x90] sm:$0xff]
    %v808 = vld [vmem:[#allocation2 + $0x98] sm:$0xff]
    %v809 = vld [vmem:[#allocation2 + $0xa0] sm:$0xff]
    %v810 = vld [vmem:[#allocation2 + $0xa8] sm:$0xff]
    %v811 = vld [vmem:[#allocation2 + $0xb0] sm:$0xff]
    %v812 = vld [vmem:[#allocation2 + $0xb8] sm:$0xff]
    %v813 = vld [vmem:[#allocation2 + $0xc0] sm:$0xff]
    %v814 = vld [vmem:[#allocation2 + $0xc8] sm:$0xff]
    %v815 = vld [vmem:[#allocation2 + $0xd0] sm:$0xff]
    %v816 = vld [vmem:[#allocation2 + $0xd8] sm:$0xff]
    %v817 = vld [vmem:[#allocation2 + $0xe0] sm:$0xff]
    %v818 = vld [vmem:[#allocation2 + $0xe8] sm:$0xff]
    %v819 = vld [vmem:[#allocation2 + $0xf0] sm:$0xff]
    %v820 = vld [vmem:[#allocation2 + $0xf8] sm:$0xff]
    %v821 = vld [vmem:[#allocation2 + $0x100] sm:$0xff]
    %v822 = vld [vmem:[#allocation2 + $0x108] sm:$0xff]
    %v823 = vld [vmem:[#allocation2 + $0x110] sm:$0xff]
    %v824 = vld [vmem:[#allocation2 + $0x118] sm:$0xff]
    %v825 = vld [vmem:[#allocation2 + $0x120] sm:$0xff]
    %v826 = vld [vmem:[#allocation2 + $0x128] sm:$0xff]
    %v827 = vld [vmem:[#allocation2 + $0x130] sm:$0xff]
    %v828 = vld [vmem:[#allocation2 + $0x138] sm:$0xff]
    %v829 = vld [vmem:[#allocation2 + $0x140] sm:$0xff]
    %v830 = vld [vmem:[#allocation2 + $0x148] sm:$0xff]
    %v831 = vld [vmem:[#allocation2 + $0x150] sm:$0xff]
    %v832 = vld [vmem:[#allocation2 + $0x158] sm:$0xff]
    %v833 = vld [vmem:[#allocation2 + $0x160] sm:$0xff]
    %v834 = vld [vmem:[#allocation2 + $0x168] sm:$0xff]
    %v835 = vld [vmem:[#allocation2 + $0x170] sm:$0xff]
    %v836 = vld [vmem:[#allocation2 + $0x178] sm:$0xff]
    %v837 = vld [vmem:[#allocation2 + $0x180] sm:$0xff]
    %v838 = vld [vmem:[#allocation2 + $0x188] sm:$0xff]
    %v839 = vld [vmem:[#allocation2 + $0x190] sm:$0xff]
    %v840 = vld [vmem:[#allocation2 + $0x198] sm:$0xff]
    %v841 = vld [vmem:[#allocation2 + $0x1a0] sm:$0xff]
    %v842 = vld [vmem:[#allocation2 + $0x1a8] sm:$0xff]
    %v843 = vld [vmem:[#allocation2 + $0x1b0] sm:$0xff]
    %v844 = vld [vmem:[#allocation2 + $0x1b8] sm:$0xff]
    %v845 = vld [vmem:[#allocation2 + $0x1c0] sm:$0xff]
    %v846 = vld [vmem:[#allocation2 + $0x1c8] sm:$0xff]
    %v847 = vld [vmem:[#allocation2 + $0x1d0] sm:$0xff]
    %v848 = vld [vmem:[#allocation2 + $0x1d8] sm:$0xff]
    %v849 = vld [vmem:[#allocation2 + $0x1e0] sm:$0xff]
    %v850 = vld [vmem:[#allocation2 + $0x1e8] sm:$0xff]
    %v851 = vld [vmem:[#allocation2 + $0x1f0] sm:$0xff]
    %v852 = vld [vmem:[#allocation2 + $0x1f8] sm:$0xff]
    %853 = vst.msk [vmem:[%s2] sm:$0xff] %vm721, %v789
    %854 = vst.msk [vmem:[%s2 + $0x8] sm:$0xff] %vm721, %v790
    %855 = vst.msk [vmem:[%s2 + $0x10] sm:$0xff] %vm721, %v791
    %856 = vst.msk [vmem:[%s2 + $0x18] sm:$0xff] %vm721, %v792
    %857 = vst.msk [vmem:[%s2 + $0x20] sm:$0xff] %vm721, %v793
    %858 = vst.msk [vmem:[%s2 + $0x28] sm:$0xff] %vm721, %v794
    %859 = vst.msk [vmem:[%s2 + $0x30] sm:$0xff] %vm721, %v795
    %860 = vst.msk [vmem:[%s2 + $0x38] sm:$0xff] %vm721, %v796
    %861 = vst.msk [vmem:[%s2 + $0x40] sm:$0xff] %vm721, %v797
    %862 = vst.msk [vmem:[%s2 + $0x48] sm:$0xff] %vm721, %v798
    %863 = vst.msk [vmem:[%s2 + $0x50] sm:$0xff] %vm721, %v799
    %864 = vst.msk [vmem:[%s2 + $0x58] sm:$0xff] %vm721, %v800
    %865 = vst.msk [vmem:[%s2 + $0x60] sm:$0xff] %vm721, %v801
    %866 = vst.msk [vmem:[%s2 + $0x68] sm:$0xff] %vm721, %v802
    %867 = vst.msk [vmem:[%s2 + $0x70] sm:$0xff] %vm721, %v803
    %868 = vst.msk [vmem:[%s2 + $0x78] sm:$0xff] %vm721, %v804
    %869 = vst.msk [vmem:[%s2 + $0x80] sm:$0xff] %vm721, %v805
    %870 = vst.msk [vmem:[%s2 + $0x88] sm:$0xff] %vm721, %v806
    %871 = vst.msk [vmem:[%s2 + $0x90] sm:$0xff] %vm721, %v807
    %872 = vst.msk [vmem:[%s2 + $0x98] sm:$0xff] %vm721, %v808
    %873 = vst.msk [vmem:[%s2 + $0xa0] sm:$0xff] %vm721, %v809
    %874 = vst.msk [vmem:[%s2 + $0xa8] sm:$0xff] %vm721, %v810
    %875 = vst.msk [vmem:[%s2 + $0xb0] sm:$0xff] %vm721, %v811
    %876 = vst.msk [vmem:[%s2 + $0xb8] sm:$0xff] %vm721, %v812
    %877 = vst.msk [vmem:[%s2 + $0xc0] sm:$0xff] %vm721, %v813
    %878 = vst.msk [vmem:[%s2 + $0xc8] sm:$0xff] %vm721, %v814
    %879 = vst.msk [vmem:[%s2 + $0xd0] sm:$0xff] %vm721, %v815
    %880 = vst.msk [vmem:[%s2 + $0xd8] sm:$0xff] %vm721, %v816
    %881 = vst.msk [vmem:[%s2 + $0xe0] sm:$0xff] %vm721, %v817
    %882 = vst.msk [vmem:[%s2 + $0xe8] sm:$0xff] %vm721, %v818
    %883 = vst.msk [vmem:[%s2 + $0xf0] sm:$0xff] %vm721, %v819
    %884 = vst.msk [vmem:[%s2 + $0xf8] sm:$0xff] %vm721, %v820
    %885 = vst.msk [vmem:[%s2 + $0x100] sm:$0xff] %vm721, %v821
    %886 = vst.msk [vmem:[%s2 + $0x108] sm:$0xff] %vm721, %v822
    %887 = vst.msk [vmem:[%s2 + $0x110] sm:$0xff] %vm721, %v823
    %888 = vst.msk [vmem:[%s2 + $0x118] sm:$0xff] %vm721, %v824
    %889 = vst.msk [vmem:[%s2 + $0x120] sm:$0xff] %vm721, %v825
    %890 = vst.msk [vmem:[%s2 + $0x128] sm:$0xff] %vm721, %v826
    %891 = vst.msk [vmem:[%s2 + $0x130] sm:$0xff] %vm721, %v827
    %892 = vst.msk [vmem:[%s2 + $0x138] sm:$0xff] %vm721, %v828
    %893 = vst.msk [vmem:[%s2 + $0x140] sm:$0xff] %vm721, %v829
    %894 = vst.msk [vmem:[%s2 + $0x148] sm:$0xff] %vm721, %v830
    %895 = vst.msk [vmem:[%s2 + $0x150] sm:$0xff] %vm721, %v831
    %896 = vst.msk [vmem:[%s2 + $0x158] sm:$0xff] %vm721, %v832
    %897 = vst.msk [vmem:[%s2 + $0x160] sm:$0xff] %vm721, %v833
    %898 = vst.msk [vmem:[%s2 + $0x168] sm:$0xff] %vm721, %v834
    %899 = vst.msk [vmem:[%s2 + $0x170] sm:$0xff] %vm721, %v835
    %900 = vst.msk [vmem:[%s2 + $0x178] sm:$0xff] %vm721, %v836
    %901 = vst.msk [vmem:[%s2 + $0x180] sm:$0xff] %vm721, %v837
    %902 = vst.msk [vmem:[%s2 + $0x188] sm:$0xff] %vm721, %v838
    %903 = vst.msk [vmem:[%s2 + $0x190] sm:$0xff] %vm721, %v839
    %904 = vst.msk [vmem:[%s2 + $0x198] sm:$0xff] %vm721, %v840
    %905 = vst.msk [vmem:[%s2 + $0x1a0] sm:$0xff] %vm721, %v841
    %906 = vst.msk [vmem:[%s2 + $0x1a8] sm:$0xff] %vm721, %v842
    %907 = vst.msk [vmem:[%s2 + $0x1b0] sm:$0xff] %vm721, %v843
    %908 = vst.msk [vmem:[%s2 + $0x1b8] sm:$0xff] %vm721, %v844
    %909 = vst.msk [vmem:[%s2 + $0x1c0] sm:$0xff] %vm721, %v845
    %910 = vst.msk [vmem:[%s2 + $0x1c8] sm:$0xff] %vm721, %v846
    %911 = vst.msk [vmem:[%s2 + $0x1d0] sm:$0xff] %vm721, %v847
    %912 = vst.msk [vmem:[%s2 + $0x1d8] sm:$0xff] %vm721, %v848
    %913 = vst.msk [vmem:[%s2 + $0x1e0] sm:$0xff] %vm721, %v849
    %914 = vst.msk [vmem:[%s2 + $0x1e8] sm:$0xff] %vm721, %v850
    %915 = vst.msk [vmem:[%s2 + $0x1f0] sm:$0xff] %vm721, %v851
    %916 = vst.msk [vmem:[%s2 + $0x1f8] sm:$0xff] %vm721, %v852
  $region17: #{tpu_custom_call.1} parent=0 // pred_fallthru
    _
  // Predicated region
  $region18: #{tpu_custom_call.1} parent=0 // pred_check
    _
  $region19: #{tpu_custom_call.1} parent=0 // pred_check_branch
    %918 = sbr.rel (0) target = $region21
  $region20: #{tpu_custom_call.1} parent=0 // pred_region
    _
  $region21: #{tpu_custom_call.1} parent=0 // pred_fallthru
    _
  // Predicated region
  $region22: #{tpu_custom_call.1} parent=0 // pred_check
    _
  $region23: #{tpu_custom_call.1} parent=0 // pred_check_branch
    %920 = sbr.rel (0) target = $region25
  $region24: #{tpu_custom_call.1} parent=0 // pred_region
    _
  $region25: #{tpu_custom_call.1} parent=0 // pred_fallthru
    _

</llo_original>
